<compile_context>
chip_gen: v6e
topology: v6e:2x2x1
jax: 0.10.0
libtpu: 0.0.40
codegen_flags: <defaults>
</compile_context>

<pallas_src>
import functools

import jax
import jax.numpy as jnp
from jax.experimental import pallas as pl
from jax.experimental.pallas import tpu as pltpu


# ----------------------------- kernels --------------------------------------

def _add_hw_prng_kernel(seed_ref, x_ref, o_ref, *, reg_noise_std):
    """out = x + reg_noise_std * N(0,1); noise drawn by the TPU hardware PRNG."""
    # Seed with (user_seed, tile_index): multi-word seeding decorrelates tiles
    # far better than `seed + program_id`.
    # TODO(synk): stream still depends on the chosen tile size; use
    # pltpu.to_pallas_key + pltpu.sample_block for fully grid-invariant noise.
    pltpu.prng_seed(seed_ref[0], pl.program_id(0))
    noise = pltpu.stateful_normal(x_ref.shape, jnp.float32)
    o_ref[...] = (x_ref[...].astype(jnp.float32)
                  + jnp.float32(reg_noise_std) * noise).astype(o_ref.dtype)


def _add_precomputed_noise_kernel(x_ref, n_ref, o_ref, *, reg_noise_std):
    """Portable path: out = x + reg_noise_std * noise (noise supplied by XLA)."""
    o_ref[...] = (x_ref[...].astype(jnp.float32)
                  + jnp.float32(reg_noise_std) * n_ref[...].astype(jnp.float32)
                  ).astype(o_ref.dtype)


# --------------------------- layout planning --------------------------------

_LANE_CHOICES = (4096, 2048, 1024, 512, 256, 128)   # lane-dense last dim
_TARGET_BLOCK_BYTES = 2 * 1024 * 1024               # ~2 MiB f32 per block


def _plan_layout(n_elems, itemsize=4):
    """Pick (lanes, rows, pad, tile_r, grid_r) for a lane-dense 2-D reflatten."""
    pad = 0
    for lanes in _LANE_CHOICES:
        if n_elems % lanes == 0:
            break
    else:
        lanes = 1024
        pad = (-n_elems) % lanes
    rows = (n_elems + pad) // lanes

    rows_per_block = max(1, _TARGET_BLOCK_BYTES // (lanes * itemsize))
    if rows_per_block >= rows:
        tile_r = rows                       # single block along rows
    else:
        tile_r = max(8, (rows_per_block // 8) * 8)   # keep (8, 128) tiling rule
    grid_r = pl.cdiv(rows, tile_r)
    return lanes, rows, pad, tile_r, grid_r


# ------------------------------ forward -------------------------------------

def input_noise_forward(net_input: jax.Array, seed: int, reg_noise_std: float):
    """Pallas equivalent of InputNoise.forward().

    net_input: the stored buffer (already scaled by `var`), any shape.
    Returns net_input + reg_noise_std * N(0,1) with the same shape/dtype.
    """
    orig_shape = net_input.shape
    orig_dtype = net_input.dtype
    n = net_input.size

    lanes, rows, pad, tile_r, grid_r = _plan_layout(n)

    flat = net_input.reshape(-1)
    if pad:
        flat = jnp.pad(flat, (0, pad))
    x2d = flat.reshape(rows, lanes)

    # index_map gets (grid_i, *scalar_prefetch_refs); absorb prefetch refs.
    block = pl.BlockSpec((tile_r, lanes), lambda i, *_: (i, 0))
    compiler_params = pltpu.CompilerParams(
        # Tiles are independent -> let v7x shard the grid across its 2 TCs.
        dimension_semantics=("parallel",),
        # 4 x ~2 MiB double-buffered blocks fit every generation's default
        # scoped VMEM (16 MiB v5e, 32 MiB v6e/v7x), so no vmem_limit_bytes.
    )

    if jax.default_backend() == "tpu":
        kernel = functools.partial(_add_hw_prng_kernel,
                                   reg_noise_std=reg_noise_std)
        seed_arr = jnp.asarray([seed], dtype=jnp.int32)
        out2d = pl.pallas_call(
            kernel,
            out_shape=jax.ShapeDtypeStruct((rows, lanes), orig_dtype),
            grid_spec=pltpu.PrefetchScalarGridSpec(
                num_scalar_prefetch=1,          # seed lands in SMEM
                grid=(grid_r,),
                in_specs=[block],
                out_specs=block,
            ),
            compiler_params=compiler_params,
        )(seed_arr, x2d)
    else:
        # TODO(synk): pltpu.prng_seed / stateful_normal have no CPU/interpret
        # lowering; generate N(0,1) with XLA and fuse only the add in Pallas.
        kernel = functools.partial(_add_precomputed_noise_kernel,
                                   reg_noise_std=reg_noise_std)
        noise2d = jax.random.normal(jax.random.PRNGKey(seed), (rows, lanes),
                                    dtype=jnp.float32)
        out2d = pl.pallas_call(
            kernel,
            out_shape=jax.ShapeDtypeStruct((rows, lanes), orig_dtype),
            grid_spec=pltpu.PrefetchScalarGridSpec(
                num_scalar_prefetch=0,
                grid=(grid_r,),
                in_specs=[block, block],
                out_specs=block,
            ),
            compiler_params=compiler_params,
        )(x2d, noise2d)

    out = out2d.reshape(-1)
    if pad:
        out = out[:n]
    return out.reshape(orig_shape)


# ------------------------- buffer initialization ----------------------------

def make_input_noise_buffer(key, spatial_size, num_channels, noise_type="u",
                            var=0.1):
    """Deterministic equivalent of InputNoise.__init__ (method='noise')."""
    if isinstance(spatial_size, int):
        spatial_size = (spatial_size, spatial_size, spatial_size)
    shape = (1, num_channels) + tuple(spatial_size)
    if noise_type == "u":
        net_input = jax.random.uniform(key, shape, dtype=jnp.float32)
    elif noise_type == "n":
        net_input = jax.random.normal(key, shape, dtype=jnp.float32)
    else:
        raise ValueError(noise_type)
    return net_input * var


# --------------------------------- demo --------------------------------------

if __name__ == "__main__":
    key = jax.random.PRNGKey(0)

    num_channels = 4
    spatial_size = 16          # int -> (16, 16, 16), so buffer is (1, 4, 16, 16, 16)
    var = 0.1
    reg_noise_std = 1e-3

    net_input = make_input_noise_buffer(
        key, spatial_size, num_channels, noise_type="u", var=var
    )

    out = input_noise_forward(net_input, seed=1234, reg_noise_std=reg_noise_std)
    out = jax.block_until_ready(out)

    assert out.shape == net_input.shape, (out.shape, net_input.shape)
    assert out.dtype == net_input.dtype
    assert bool(jnp.all(jnp.isfinite(out)))
    # Perturbation should be tiny (O(reg_noise_std)) but non-zero.
    delta = out - net_input
    assert float(jnp.max(jnp.abs(delta))) < 10.0 * reg_noise_std
    assert float(jnp.max(jnp.abs(delta))) > 0.0

    print("KERNEL_OK")
</pallas_src>

<mosaic_0001>
module attributes {stable_mosaic.version = 11 : i64} {
  func.func @_add_precomputed_noise_kernel(%arg0: i32, %arg1: memref<4x4096xf32, #tpu.memory_space<vmem>>, %arg2: memref<4x4096xf32, #tpu.memory_space<vmem>>, %arg3: memref<4x4096xf32, #tpu.memory_space<vmem>>) attributes {dimension_semantics = [#tpu.dimension_semantics<parallel>], iteration_bounds = array<i64: 1>, scalar_prefetch = 0 : i64, scratch_operands = 0 : i64, tpu.core_type = #tpu.core_type<tc>, window_params = [{transform_indices = @transform_0, window_bounds = array<i64: 4, 4096>}, {transform_indices = @transform_1, window_bounds = array<i64: 4, 4096>}, {transform_indices = @transform_2, window_bounds = array<i64: 4, 4096>}]} {
    %c0 = arith.constant 0 : index
    %c0_0 = arith.constant 0 : index
    %0 = vector.load %arg1[%c0, %c0_0] : memref<4x4096xf32, #tpu.memory_space<vmem>>, vector<4x4096xf32>
    %c0_1 = arith.constant 0 : index
    %c0_2 = arith.constant 0 : index
    %1 = vector.load %arg2[%c0_1, %c0_2] : memref<4x4096xf32, #tpu.memory_space<vmem>>, vector<4x4096xf32>
    %cst = arith.constant 1.000000e-03 : f32
    %2 = vector.broadcast %cst : f32 to vector<4x4096xf32>
    %3 = arith.mulf %2, %1 : vector<4x4096xf32>
    %4 = arith.addf %0, %3 : vector<4x4096xf32>
    %c0_3 = arith.constant 0 : index
    %c0_4 = arith.constant 0 : index
    %5 = vector.load %arg3[%c0_3, %c0_4] : memref<4x4096xf32, #tpu.memory_space<vmem>>, vector<4x4096xf32>
    tpu.vector_store %arg3[%c0_3, %c0_4], %4 {strides = array<i32>} : memref<4x4096xf32, #tpu.memory_space<vmem>>, vector<4x4096xf32>,
    return
  }
  func.func @transform_0(%arg0: i32) -> (i32, i32) {
    %c0_i32 = arith.constant 0 : i32
    %c0_i32_0 = arith.constant 0 : i32
    return %arg0, %c0_i32 : i32, i32
  }
  func.func @transform_1(%arg0: i32) -> (i32, i32) {
    %c0_i32 = arith.constant 0 : i32
    %c0_i32_0 = arith.constant 0 : i32
    return %arg0, %c0_i32 : i32, i32
  }
  func.func @transform_2(%arg0: i32) -> (i32, i32) {
    %c0_i32 = arith.constant 0 : i32
    %c0_i32_0 = arith.constant 0 : i32
    return %arg0, %c0_i32 : i32, i32
  }
}

</mosaic_0001>

<llo_original>
// kernel: tpu_custom_call.1
$region0: #{tpu_custom_call.1}
  #allocation0 [shape = 'u32[]', space=smem, size = 0x4, offset = 0x4, fixed_abs, tag = 'smem constant byte address 0x4 - core index']
  #allocation1 [shape = 'u32[144,128]{1,0:T(1,128)}', space=vmem, size = 0x12000, scoped, tag = 'internal scratch']
  %s0 = inlined_call_operand.hbm [shape: f32[4,4096], index: 0, kind: input, shape index: {}]
  %s1 = inlined_call_operand.hbm [shape: f32[4,4096], index: 1, kind: input, shape index: {}]
  %s2 = inlined_call_operand.hbm [shape: f32[4,4096], index: 2, kind: output, shape index: {}]
  %s3 = sld [smem:[#allocation0]]
  $region26: #{tpu_custom_call.1} parent=0
    _
  %s5 = ssub.s32 1, %s3
  %s6 = scalar_select 0, %s5, %s3
  $region1: #{tpu_custom_call.1} parent=0
    #allocation2 [shape = 'u8[65536]{0}', space=vmem, size = 0x10000, scoped, tag = 'input window, operand 0, single buffered']
    #allocation3 [shape = 's32[1]{0}', space=sflag, size = 0x4, scoped, tag = 'scoped memory for tpu_custom_call.1']
    #allocation4 [shape = 's32[1]{0}', space=sflag, size = 0x4, scoped, tag = 'scoped memory for tpu_custom_call.1']
    #allocation5 [shape = 'u8[65536]{0}', space=vmem, size = 0x10000, scoped, tag = 'input window, operand 1, single buffered']
    #allocation6 [shape = 's32[1]{0}', space=sflag, size = 0x4, scoped, tag = 'scoped memory for tpu_custom_call.1']
    #allocation7 [shape = 'u8[65536]{0}', space=vmem, size = 0x10000, scoped, tag = 'output window, operand 0, single buffered']
    %7 = vsyncpa [#allocation3], 0
    %8 = vsyncpa [#allocation6], 0
    %9 = vsyncpa [#allocation4], 0
    // Predicated region
    $region2: #{tpu_custom_call.1} parent=1 // pred_check
      _
    $region3: #{tpu_custom_call.1} parent=1 // pred_check_branch
      %11 = sbr.rel (0) target = $region5
    $region4: #{tpu_custom_call.1} parent=1 // pred_region
      %s13 = ssub.s32 2048, 2048
      %14 = vsyncadd [#allocation3], %s13
      %s16 = sshll.u32 [#allocation2], 4
      %s17 = int_to_ptr.vmem [resolvable:$true] %s16
      %19 = dma.hbm_to_vmem [thread:$0]  %s0, 2048, %s17, [#allocation3]
    $region5: #{tpu_custom_call.1} parent=1 // pred_fallthru
      _
    // Predicated region
    $region6: #{tpu_custom_call.1} parent=1 // pred_check
      _
    $region7: #{tpu_custom_call.1} parent=1 // pred_check_branch
      %21 = sbr.rel (0) target = $region9
    $region8: #{tpu_custom_call.1} parent=1 // pred_region
      %s23 = ssub.s32 2048, 2048
      %24 = vsyncadd [#allocation6], %s23
      %s26 = sshll.u32 [#allocation5], 4
      %s27 = int_to_ptr.vmem [resolvable:$true] %s26
      %29 = dma.hbm_to_vmem [thread:$0]  %s1, 2048, %s27, [#allocation6]
    $region9: #{tpu_custom_call.1} parent=1 // pred_fallthru
      _
    // Predicated region
    $region10: #{tpu_custom_call.1} parent=1 // pred_check
      _
    $region11: #{tpu_custom_call.1} parent=1 // pred_check_branch
      %31 = sbr.rel (0) target = $region13
    $region12: #{tpu_custom_call.1} parent=1 // pred_region
      %32 = dma.done [#allocation3], 2048
    $region13: #{tpu_custom_call.1} parent=1 // pred_fallthru
      _
    // Predicated region
    $region14: #{tpu_custom_call.1} parent=1 // pred_check
      _
    $region15: #{tpu_custom_call.1} parent=1 // pred_check_branch
      %34 = sbr.rel (0) target = $region17
    $region16: #{tpu_custom_call.1} parent=1 // pred_region
      %35 = dma.done [#allocation6], 2048
    $region17: #{tpu_custom_call.1} parent=1 // pred_fallthru
      _
    %v36 = vld [vmem:[#allocation2] sm:$0xff]
    %v37 = vld [vmem:[#allocation2 + $0x8] sm:$0xff]
    %v38 = vld [vmem:[#allocation2 + $0x10] sm:$0xff]
    %v39 = vld [vmem:[#allocation2 + $0x18] sm:$0xff]
    %v40 = vld [vmem:[#allocation2 + $0x20] sm:$0xff]
    %v41 = vld [vmem:[#allocation2 + $0x28] sm:$0xff]
    %v42 = vld [vmem:[#allocation2 + $0x30] sm:$0xff]
    %v43 = vld [vmem:[#allocation2 + $0x38] sm:$0xff]
    %v44 = vld [vmem:[#allocation2 + $0x40] sm:$0xff]
    %v45 = vld [vmem:[#allocation2 + $0x48] sm:$0xff]
    %v46 = vld [vmem:[#allocation2 + $0x50] sm:$0xff]
    %v47 = vld [vmem:[#allocation2 + $0x58] sm:$0xff]
    %v48 = vld [vmem:[#allocation2 + $0x60] sm:$0xff]
    %v49 = vld [vmem:[#allocation2 + $0x68] sm:$0xff]
    %v50 = vld [vmem:[#allocation2 + $0x70] sm:$0xff]
    %v51 = vld [vmem:[#allocation2 + $0x78] sm:$0xff]
    %v52 = vld [vmem:[#allocation5] sm:$0xff]
    %v53 = vld [vmem:[#allocation5 + $0x8] sm:$0xff]
    %v54 = vld [vmem:[#allocation5 + $0x10] sm:$0xff]
    %v55 = vld [vmem:[#allocation5 + $0x18] sm:$0xff]
    %v56 = vld [vmem:[#allocation5 + $0x20] sm:$0xff]
    %v57 = vld [vmem:[#allocation5 + $0x28] sm:$0xff]
    %v58 = vld [vmem:[#allocation5 + $0x30] sm:$0xff]
    %v59 = vld [vmem:[#allocation5 + $0x38] sm:$0xff]
    %v60 = vld [vmem:[#allocation5 + $0x40] sm:$0xff]
    %v61 = vld [vmem:[#allocation5 + $0x48] sm:$0xff]
    %v62 = vld [vmem:[#allocation5 + $0x50] sm:$0xff]
    %v63 = vld [vmem:[#allocation5 + $0x58] sm:$0xff]
    %v64 = vld [vmem:[#allocation5 + $0x60] sm:$0xff]
    %v65 = vld [vmem:[#allocation5 + $0x68] sm:$0xff]
    %v66 = vld [vmem:[#allocation5 + $0x70] sm:$0xff]
    %v67 = vld [vmem:[#allocation5 + $0x78] sm:$0xff]
    %v68 = vmul.f32 %v52, 0.001
    %v69 = vmul.f32 %v53, 0.001
    %v70 = vmul.f32 %v54, 0.001
    %v71 = vmul.f32 %v55, 0.001
    %v72 = vmul.f32 %v56, 0.001
    %v73 = vmul.f32 %v57, 0.001
    %v74 = vmul.f32 %v58, 0.001
    %v75 = vmul.f32 %v59, 0.001
    %v76 = vmul.f32 %v60, 0.001
    %v77 = vmul.f32 %v61, 0.001
    %v78 = vmul.f32 %v62, 0.001
    %v79 = vmul.f32 %v63, 0.001
    %v80 = vmul.f32 %v64, 0.001
    %v81 = vmul.f32 %v65, 0.001
    %v82 = vmul.f32 %v66, 0.001
    %v83 = vmul.f32 %v67, 0.001
    %v84 = vadd.f32 %v36, %v68
    %v85 = vadd.f32 %v37, %v69
    %v86 = vadd.f32 %v38, %v70
    %v87 = vadd.f32 %v39, %v71
    %v88 = vadd.f32 %v40, %v72
    %v89 = vadd.f32 %v41, %v73
    %v90 = vadd.f32 %v42, %v74
    %v91 = vadd.f32 %v43, %v75
    %v92 = vadd.f32 %v44, %v76
    %v93 = vadd.f32 %v45, %v77
    %v94 = vadd.f32 %v46, %v78
    %v95 = vadd.f32 %v47, %v79
    %v96 = vadd.f32 %v48, %v80
    %v97 = vadd.f32 %v49, %v81
    %v98 = vadd.f32 %v50, %v82
    %v99 = vadd.f32 %v51, %v83
    %100 = vst [vmem:[#allocation7] sm:$0xff] %v84
    %101 = vst [vmem:[#allocation7 + $0x8] sm:$0xff] %v85
    %102 = vst [vmem:[#allocation7 + $0x10] sm:$0xff] %v86
    %103 = vst [vmem:[#allocation7 + $0x18] sm:$0xff] %v87
    %104 = vst [vmem:[#allocation7 + $0x20] sm:$0xff] %v88
    %105 = vst [vmem:[#allocation7 + $0x28] sm:$0xff] %v89
    %106 = vst [vmem:[#allocation7 + $0x30] sm:$0xff] %v90
    %107 = vst [vmem:[#allocation7 + $0x38] sm:$0xff] %v91
    %108 = vst [vmem:[#allocation7 + $0x40] sm:$0xff] %v92
    %109 = vst [vmem:[#allocation7 + $0x48] sm:$0xff] %v93
    %110 = vst [vmem:[#allocation7 + $0x50] sm:$0xff] %v94
    %111 = vst [vmem:[#allocation7 + $0x58] sm:$0xff] %v95
    %112 = vst [vmem:[#allocation7 + $0x60] sm:$0xff] %v96
    %113 = vst [vmem:[#allocation7 + $0x68] sm:$0xff] %v97
    %114 = vst [vmem:[#allocation7 + $0x70] sm:$0xff] %v98
    %115 = vst [vmem:[#allocation7 + $0x78] sm:$0xff] %v99
    // Predicated region
    $region18: #{tpu_custom_call.1} parent=1 // pred_check
      _
    $region19: #{tpu_custom_call.1} parent=1 // pred_check_branch
      %117 = sbr.rel (0) target = $region21
    $region20: #{tpu_custom_call.1} parent=1 // pred_region
      %s119 = ssub.s32 2048, 2048
      %120 = vsyncadd [#allocation4], %s119
      %s122 = sshll.u32 [#allocation7], 4
      %s123 = int_to_ptr.vmem [resolvable:$true] %s122
      %125 = dma.vmem_to_hbm [thread:$0]  %s123, 2048, %s2, [#allocation4]
    $region21: #{tpu_custom_call.1} parent=1 // pred_fallthru
      _
    // Predicated region
    $region22: #{tpu_custom_call.1} parent=1 // pred_check
      _
    $region23: #{tpu_custom_call.1} parent=1 // pred_check_branch
      %127 = sbr.rel (0) target = $region25
    $region24: #{tpu_custom_call.1} parent=1 // pred_region
      %128 = dma.done [#allocation4], 2048
    $region25: #{tpu_custom_call.1} parent=1 // pred_fallthru
      _
    %129 = vsyncpa [#allocation3], 1
    %130 = vsyncpa [#allocation6], 1
    %131 = vsyncpa [#allocation4], 1

</llo_original>
